<compile_context>
chip_gen: v7x
topology: tpu7x:2x2x1
jax: 0.10.0
libtpu: 0.0.40
codegen_flags: <defaults>
</compile_context>

<pallas_src>
import math
from functools import partial

import jax
import jax.numpy as jnp
from jax.experimental import pallas as pl
from jax.experimental.pallas import tpu as pltpu


def _ip_adapter_attn_kernel(q_ref, kbd_ref, vbd_ref, o_ref, *,
                            heads, ip_tokens, t_pad):
    """grid = (B, S_pad // tS); one step handles one (batch, S-tile) pair.

    q_ref   : (1, tS, H*D)        lane-dense query tile (input dtype)
    kbd_ref : (1, H*T_pad, H*D)   block-diagonal ip_k, pre-scaled by 1/sqrt(D)
    vbd_ref : (1, H*T_pad, H*D)   block-diagonal ip_v, pre-scaled by `weight`
    o_ref   : (1, tS, H*D)        output tile
    """
    q = q_ref[0]                                           # (tS, H*D)
    k_bd = kbd_ref[0]                                      # (H*T_pad, H*D)
    v_bd = vbd_ref[0]                                      # (H*T_pad, H*D)

    # One full-width MXU call; scores transposed so S sits on the 128-lane
    # axis (lane-dense softmax) and heads*tokens sit on sublanes.
    s_all = jax.lax.dot_general(k_bd, q, (((1,), (1,)), ((), ())),
                                preferred_element_type=jnp.float32)  # (H*T_pad, tS)
    ts = s_all.shape[-1]

    # Per-head softmax over each head's T_pad-row block.  t_pad % 8 == 0, so
    # this reshape only regroups whole sublane tiles (no cross-vreg shuffle).
    s3 = s_all.reshape(heads, t_pad, ts)
    if t_pad != ip_tokens:
        # mask the zero-padded token rows out of the softmax
        tok = jax.lax.broadcasted_iota(jnp.int32, s3.shape, 1)
        s3 = jnp.where(tok < ip_tokens, s3, -1e30)
    m = jnp.max(s3, axis=1, keepdims=True)                 # (H, 1, tS)
    p3 = jnp.exp(s3 - m)                                   # (H, T_pad, tS) f32
    denom = jnp.sum(p3, axis=1, keepdims=True)             # (H, 1, tS)
    p3 = p3 * pl.reciprocal(denom, approx=True)            # EUP slot, VALU free
    p_all = p3.reshape(heads * t_pad, ts).astype(v_bd.dtype)

    # Second full-width MXU call; one unmasked lane-dense store.
    out = jax.lax.dot_general(p_all, v_bd, (((0,), (0,)), ((), ())),
                              preferred_element_type=jnp.float32)    # (tS, H*D)
    o_ref[0] = out.astype(o_ref.dtype)


def _block_diag_per_head(x, heads, head_dim, t_pad):
    """(B, T, H*D) -> (B, H*t_pad, H*D) block-diagonal per head.

    Row block h (rows h*t_pad .. h*t_pad+T-1) holds head h's (T, D) slice in
    column block h; everything else (incl. the T..t_pad padding rows) is zero.
    """
    B, T, _ = x.shape
    x4 = x.reshape(B, T, heads, head_dim)
    if t_pad != T:
        x4 = jnp.pad(x4, ((0, 0), (0, t_pad - T), (0, 0), (0, 0)))
    eye = jnp.eye(heads, dtype=x.dtype)
    bd = jnp.einsum('hg,btgd->bhtgd', eye, x4)             # zero except g == h
    return bd.reshape(B, heads * t_pad, heads * head_dim)


def _vmem_capacity_bytes():
    try:
        cap = int(pltpu.get_tpu_info().vmem_capacity_bytes)
        if cap > 0:
            return cap
    except Exception:
        pass
    return 64 * 1024 * 1024        # conservative fallback: v7x per-TC VMEM


def _pick_s_tile(seq_len, inner, itemsize, budget_bytes, ts_cap):
    """Largest S tile (multiple of the dtype sublane granularity) that keeps
    double-buffered q + out tiles within the VMEM budget."""
    mult = max(8, 32 // max(1, itemsize))    # 8 (f32), 16 (bf16), 32 (int8/fp8)
    per_row = 4 * inner * itemsize           # q tile + out tile, double-buffered
    max_ts = budget_bytes // per_row if per_row > 0 else ts_cap
    max_ts = (max_ts // mult) * mult
    seq_rounded = -(-seq_len // mult) * mult
    return int(max(mult, min(ts_cap, max_ts, seq_rounded)))


def ip_adapter_forward(q, image_emb, wk_t, wv_t, *, weight, heads=None,
                       p_start=0.0, p_end=1.0, current_sampling_percent=0.5):
    """JAX/Pallas port of PlugableIPAdapter.patch_forward(...)'s inner forward.

    q may be (B, H, S, D) (the layout torch feeds sdpa) or already lane-dense
    (B, S, H*D) together with heads=H — the latter skips the HBM transpose.
    Returns python 0.0 when gated off (like the torch code), otherwise an
    array (B, S, H*D) == ip_out * weight.
    """
    if (current_sampling_percent < p_start or
            current_sampling_percent > p_end or weight == 0.0):
        return 0.0
    # TODO(synk): effective_region_mask bilinear-interpolation path not
    # implemented; only the default mask=None path is reproduced here.

    if q.ndim == 4:                     # (B, H, S, D) -> lane-dense (B, S, H*D)
        B, H, S, D = q.shape
        q_flat = q.transpose(0, 2, 1, 3).reshape(B, S, H * D)
    else:
        assert heads is not None, "pass heads= when q is (B, S, H*D)"
        B, S, inner_dim = q.shape
        H = heads
        assert inner_dim % H == 0
        D = inner_dim // H
        q_flat = q
    inner = H * D
    _, T, C = image_emb.shape

    # ---- hoisted projections (tiny) + scale / weight folding ----------------
    ip_k = jnp.einsum('btc,cd->btd', image_emb, wk_t) * float(1.0 / math.sqrt(D))
    ip_v = jnp.einsum('btc,cd->btd', image_emb, wv_t) * float(weight)
    ip_k = ip_k.astype(q_flat.dtype)        # torch casts ip_k/ip_v to query dtype
    ip_v = ip_v.astype(q_flat.dtype)

    # Block-diagonal K / V so the kernel needs only two full-width MXU calls.
    t_pad = -(-T // 8) * 8                  # sublane-tile aligned per-head blocks
    k_bd = _block_diag_per_head(ip_k, H, D, t_pad)       # (B, H*t_pad, inner)
    v_bd = _block_diag_per_head(ip_v, H, D, t_pad)

    # ---- generation-aware tiling / VMEM budget -------------------------------
    itemsize = jnp.dtype(q_flat.dtype).itemsize
    vmem_cap = _vmem_capacity_bytes()
    vmem_limit = min(vmem_cap * 3 // 4, 96 * 1024 * 1024)  # 96 MiB on 128-MiB parts, 48 MiB on v7x
    resident = 4 * (H * t_pad) * inner * itemsize           # k_bd + v_bd blocks (2 bufs each)
    ts_cap = 1024 if vmem_cap >= (128 << 20) else 512       # bigger tiles on v5e/v6e
    budget = vmem_limit - resident - (8 << 20)              # slack for f32 intermediates
    ts = _pick_s_tile(S, inner, itemsize, budget, ts_cap)

    n_s = -(-S // ts)
    s_pad = n_s * ts
    if s_pad != S:     # padded q rows give a finite uniform softmax; sliced off below
        q_flat = jnp.pad(q_flat, ((0, 0), (0, s_pad - S), (0, 0)))

    kernel = partial(_ip_adapter_attn_kernel, heads=H, ip_tokens=T, t_pad=t_pad)
    out = pl.pallas_call(
        kernel,
        out_shape=jax.ShapeDtypeStruct((B, s_pad, inner), q_flat.dtype),
        grid_spec=pltpu.PrefetchScalarGridSpec(
            num_scalar_prefetch=0,
            grid=(B, n_s),
            in_specs=[
                # lane-dense query tiles, pipelined over (b, s)
                pl.BlockSpec((1, ts, inner), lambda b, s: (b, s, 0)),
                # per-batch block-diagonal K / V (revisited across S tiles, no re-DMA)
                pl.BlockSpec((1, H * t_pad, inner), lambda b, s: (b, 0, 0)),
                pl.BlockSpec((1, H * t_pad, inner), lambda b, s: (b, 0, 0)),
            ],
            out_specs=pl.BlockSpec((1, ts, inner), lambda b, s: (b, s, 0)),
        ),
        compiler_params=pltpu.CompilerParams(
            # No cross-step state: both axes parallel (megacore can shard S
            # across TensorCores even for single-batch calls).
            dimension_semantics=("parallel", "parallel"),
            vmem_limit_bytes=int(vmem_limit),
        ),
    )(q_flat, k_bd, v_bd)

    if s_pad != S:
        out = out[:, :S, :]
    return out


def _reference(q, image_emb, wk_t, wv_t, weight):
    """Pure-JAX reference mirroring _attn_eval_ipadapter + weight scaling."""
    B, H, S, D = q.shape
    ip_k = (image_emb @ wk_t).reshape(B, -1, H, D).transpose(0, 2, 1, 3)
    ip_v = (image_emb @ wv_t).reshape(B, -1, H, D).transpose(0, 2, 1, 3)
    s = jnp.einsum('bhsd,bhtd->bhst', q, ip_k) / math.sqrt(D)
    p = jax.nn.softmax(s, axis=-1)
    o = jnp.einsum('bhst,bhtd->bhsd', p, ip_v)
    return o.transpose(0, 2, 1, 3).reshape(B, S, H * D) * weight


if __name__ == "__main__":
    # Small shapes implied by the forward: cond+uncond batch, multi-head attn,
    # a handful of IP image tokens, cross-attention-dim image embedding.
    B, H, S, D = 2, 4, 16, 8          # inner_dim = H*D = 32
    T, C = 4, 32                      # ip tokens, cross-attention dim
    weight = 0.75

    key = jax.random.PRNGKey(0)
    kq, ke, kk, kv, kq2 = jax.random.split(key, 5)
    q = jax.random.normal(kq, (B, H, S, D), dtype=jnp.float32)
    image_emb = jax.random.normal(ke, (B, T, C), dtype=jnp.float32)
    # torch nn.Linear(C, H*D, bias=False) stores W as (out, in) = (H*D, C);
    # passed pre-transposed so the wrapper computes emb @ W.T directly.
    wk = jax.random.normal(kk, (H * D, C), dtype=jnp.float32) * 0.05
    wv = jax.random.normal(kv, (H * D, C), dtype=jnp.float32) * 0.05
    wk_t, wv_t = wk.T, wv.T

    out = ip_adapter_forward(q, image_emb, wk_t, wv_t, weight=weight)
    out = jax.block_until_ready(out)
    ref = _reference(q, image_emb, wk_t, wv_t, weight)
    assert out.shape == (B, S, H * D)
    max_err = float(jnp.max(jnp.abs(out - ref)))
    assert jnp.allclose(out, ref, atol=5e-3, rtol=5e-3), max_err

    # Lane-dense (pre-sdpa layout) fast path produces the same result.
    q_flat = q.transpose(0, 2, 1, 3).reshape(B, S, H * D)
    out2 = ip_adapter_forward(q_flat, image_emb, wk_t, wv_t,
                              weight=weight, heads=H)
    out2 = jax.block_until_ready(out2)
    assert jnp.allclose(out, out2, atol=1e-6, rtol=1e-6)

    # Sequence length that is not a multiple of the tile: exercises the
    # zero-pad + slice path.
    S2 = 20
    q2 = jax.random.normal(kq2, (B, H, S2, D), dtype=jnp.float32)
    out3 = ip_adapter_forward(q2, image_emb, wk_t, wv_t, weight=weight)
    out3 = jax.block_until_ready(out3)
    ref3 = _reference(q2, image_emb, wk_t, wv_t, weight)
    assert out3.shape == (B, S2, H * D)
    max_err3 = float(jnp.max(jnp.abs(out3 - ref3)))
    assert jnp.allclose(out3, ref3, atol=5e-3, rtol=5e-3), max_err3

    # Gated-off path returns scalar 0.0 like the torch module.
    assert ip_adapter_forward(q, image_emb, wk_t, wv_t, weight=0.0) == 0.0

    print("KERNEL_OK")
</pallas_src>

<mosaic_0001>
module attributes {stable_mosaic.version = 11 : i64} {
  func.func @_ip_adapter_attn_kernel(%arg0: i32, %arg1: i32, %arg2: memref<1x16x32xf32, #tpu.memory_space<vmem>>, %arg3: memref<1x32x32xf32, #tpu.memory_space<vmem>>, %arg4: memref<1x32x32xf32, #tpu.memory_space<vmem>>, %arg5: memref<1x16x32xf32, #tpu.memory_space<vmem>>) attributes {dimension_semantics = [#tpu.dimension_semantics<parallel>, #tpu.dimension_semantics<parallel>], iteration_bounds = array<i64: 2, 1>, scalar_prefetch = 0 : i64, scratch_operands = 0 : i64, tpu.core_type = #tpu.core_type<tc>, window_params = [{transform_indices = @transform_0, window_bounds = array<i64: 1, 16, 32>}, {transform_indices = @transform_1, window_bounds = array<i64: 1, 32, 32>}, {transform_indices = @transform_2, window_bounds = array<i64: 1, 32, 32>}, {transform_indices = @transform_3, window_bounds = array<i64: 1, 16, 32>}]} {
    %c0 = arith.constant 0 : index
    %c0_0 = arith.constant 0 : index
    %c0_1 = arith.constant 0 : index
    %0 = vector.load %arg2[%c0, %c0_0, %c0_1] : memref<1x16x32xf32, #tpu.memory_space<vmem>>, vector<1x16x32xf32>
    %1 = vector.shape_cast %0 : vector<1x16x32xf32> to vector<16x32xf32>
    %c0_2 = arith.constant 0 : index
    %c0_3 = arith.constant 0 : index
    %c0_4 = arith.constant 0 : index
    %2 = vector.load %arg3[%c0_2, %c0_3, %c0_4] : memref<1x32x32xf32, #tpu.memory_space<vmem>>, vector<1x32x32xf32>
    %3 = vector.shape_cast %2 : vector<1x32x32xf32> to vector<32x32xf32>
    %c0_5 = arith.constant 0 : index
    %c0_6 = arith.constant 0 : index
    %c0_7 = arith.constant 0 : index
    %4 = vector.load %arg4[%c0_5, %c0_6, %c0_7] : memref<1x32x32xf32, #tpu.memory_space<vmem>>, vector<1x32x32xf32>
    %5 = vector.shape_cast %4 : vector<1x32x32xf32> to vector<32x32xf32>
    %cst = arith.constant dense<0.000000e+00> : vector<32x16xf32>
    %6 = tpu.matmul %3, %1, %cst {dimension_numbers = #tpu.dot_dimension_numbers<[1], [1], [0], [0], [0, 0, 1, 0], [], []>} : vector<32x32xf32>, vector<16x32xf32>, vector<32x16xf32> -> vector<32x16xf32>
    %7 = vector.shape_cast %6 : vector<32x16xf32> to vector<4x8x16xf32>
    %8 = tpu.iota {dimensions = array<i32: 1>} : vector<4x8x16xi32>
    %c4_i32 = arith.constant 4 : i32
    %9 = vector.broadcast %c4_i32 : i32 to vector<4x8x16xi32>
    %10 = arith.cmpi slt, %8, %9 : vector<4x8x16xi32>
    %cst_8 = arith.constant -1.000000e+30 : f32
    %11 = vector.broadcast %cst_8 : f32 to vector<4x8x16xf32>
    %12 = arith.select %10, %7, %11 : vector<4x8x16xi1>, vector<4x8x16xf32>
    %cst_9 = arith.constant dense<0xFF800000> : vector<4x16xf32>
    %13 = vector.multi_reduction <maximumf>, %12, %cst_9 [1] : vector<4x8x16xf32> to vector<4x16xf32>
    %14 = vector.shape_cast %13 : vector<4x16xf32> to vector<4x1x16xf32>
    %15 = vector.broadcast %14 : vector<4x1x16xf32> to vector<4x8x16xf32>
    %16 = arith.subf %12, %15 : vector<4x8x16xf32>
    %17 = math.exp %16 : vector<4x8x16xf32>
    %cst_10 = arith.constant dense<0.000000e+00> : vector<4x16xf32>
    %18 = vector.multi_reduction <add>, %17, %cst_10 [1] : vector<4x8x16xf32> to vector<4x16xf32>
    %19 = vector.shape_cast %18 : vector<4x16xf32> to vector<4x1x16xf32>
    %20 = tpu.reciprocal %19 {approx = true} : vector<4x1x16xf32> -> vector<4x1x16xf32>
    %21 = vector.broadcast %20 : vector<4x1x16xf32> to vector<4x8x16xf32>
    %22 = arith.mulf %17, %21 : vector<4x8x16xf32>
    %23 = vector.shape_cast %22 : vector<4x8x16xf32> to vector<32x16xf32>
    %cst_11 = arith.constant dense<0.000000e+00> : vector<16x32xf32>
    %24 = tpu.matmul %23, %5, %cst_11 {dimension_numbers = #tpu.dot_dimension_numbers<[0], [0], [1], [1], [0, 1, 1, 1], [], []>} : vector<32x16xf32>, vector<32x32xf32>, vector<16x32xf32> -> vector<16x32xf32>
    %c0_12 = arith.constant 0 : index
    %c0_13 = arith.constant 0 : index
    %c0_14 = arith.constant 0 : index
    %25 = vector.load %arg5[%c0_12, %c0_13, %c0_14] : memref<1x16x32xf32, #tpu.memory_space<vmem>>, vector<1x16x32xf32>
    %26 = vector.shape_cast %25 : vector<1x16x32xf32> to vector<16x32xf32>
    %27 = vector.shape_cast %24 : vector<16x32xf32> to vector<1x16x32xf32>
    tpu.vector_store %arg5[%c0_12, %c0_13, %c0_14], %27 {strides = array<i32>} : memref<1x16x32xf32, #tpu.memory_space<vmem>>, vector<1x16x32xf32>,
    return
  }
  func.func @transform_0(%arg0: i32, %arg1: i32) -> (i32, i32, i32) {
    %c0_i32 = arith.constant 0 : i32
    %c0_i32_0 = arith.constant 0 : i32
    return %arg0, %arg1, %c0_i32 : i32, i32, i32
  }
  func.func @transform_1(%arg0: i32, %arg1: i32) -> (i32, i32, i32) {
    %c0_i32 = arith.constant 0 : i32
    %c0_i32_0 = arith.constant 0 : i32
    %c0_i32_1 = arith.constant 0 : i32
    return %arg0, %c0_i32, %c0_i32_0 : i32, i32, i32
  }
  func.func @transform_2(%arg0: i32, %arg1: i32) -> (i32, i32, i32) {
    %c0_i32 = arith.constant 0 : i32
    %c0_i32_0 = arith.constant 0 : i32
    %c0_i32_1 = arith.constant 0 : i32
    return %arg0, %c0_i32, %c0_i32_0 : i32, i32, i32
  }
  func.func @transform_3(%arg0: i32, %arg1: i32) -> (i32, i32, i32) {
    %c0_i32 = arith.constant 0 : i32
    %c0_i32_0 = arith.constant 0 : i32
    return %arg0, %arg1, %c0_i32 : i32, i32, i32
  }
}

</mosaic_0001>

<llo_original>
// kernel: tpu_custom_call.1
$region0: #{tpu_custom_call.1}
  #allocation0 [shape = 'u32[]', space=smem, size = 0x4, offset = 0x4, fixed_abs, tag = 'smem constant byte address 0x4 - core index']
  #allocation1 [shape = 'u32[144,128]{1,0:T(1,128)}', space=vmem, size = 0x12000, scoped, tag = 'internal scratch']
  %s0 = inlined_call_operand.hbm [shape: f32[2,16,32], index: 0, kind: input, shape index: {}]
  %s1 = inlined_call_operand.hbm [shape: f32[2,32,32], index: 1, kind: input, shape index: {}]
  %s2 = inlined_call_operand.hbm [shape: f32[2,32,32], index: 2, kind: input, shape index: {}]
  %s3 = inlined_call_operand.hbm [shape: f32[2,16,32], index: 3, kind: output, shape index: {}]
  %s4 = sld [smem:[#allocation0]]
  $region57: #{tpu_custom_call.1} parent=0
    _
  %s6 = ssub.s32 1, %s4
  %s7 = scalar_select 0, %s6, %s4
  $region1: #{tpu_custom_call.1} parent=0
    #allocation2 [shape = 'u8[16384]{0}', space=vmem, size = 0x4000, scoped, tag = 'input window, operand 0']
    #allocation3 [shape = 's32[2]{0}', space=sflag, size = 0x8, scoped, tag = 'scoped memory for tpu_custom_call.1']
    #allocation4 [shape = 's32[2]{0}', space=sflag, size = 0x8, scoped, tag = 'scoped memory for tpu_custom_call.1']
    #allocation5 [shape = 'u8[32768]{0}', space=vmem, size = 0x8000, scoped, tag = 'input window, operand 1']
    #allocation6 [shape = 's32[2]{0}', space=sflag, size = 0x8, scoped, tag = 'scoped memory for tpu_custom_call.1']
    #allocation7 [shape = 'u8[32768]{0}', space=vmem, size = 0x8000, scoped, tag = 'input window, operand 2']
    #allocation8 [shape = 'u8[16384]{0}', space=vmem, size = 0x4000, scoped, tag = 'output window, operand 0']
    %8 = vsyncpa [#allocation3], 0
    %s9 = scalar_lea.sflag [#allocation3], 1
    %10 = vsyncpa %s9, 0
    %11 = vsyncpa [#allocation6], 0
    %s12 = scalar_lea.sflag [#allocation6], 1
    %13 = vsyncpa %s12, 0
    %14 = vsyncpa [#allocation4], 0
    %s15 = scalar_lea.sflag [#allocation4], 1
    %16 = vsyncpa %s15, 0
    loop: start=0, step=1, limit=4
    $region2: #{tpu_custom_call.1} parent=1 // loop_pre_header
      _
    $region3: #{tpu_custom_call.1} parent=1 // loop_header
      %s18 = sphi 0, %s22
      %p19 = scmp.ge.s32.totalorder %s18, 4
      %s25 = sphi 0, %s37
      %s26 = sphi 0, %s33
      %s27 = sphi 0, %s25
      %s28 = sphi 0, %s26
      %s29 = sphi 0, %s27
      %s30 = sphi 0, %s28
      %s42 = sphi 0, %s44
      %s45 = sphi 0, %s42
      %s46 = sphi 0, %s45
      %s62 = sphi 0, %s46
      %s68 = sphi 0, %s70
      %s71 = sphi 0, %s68
      %s72 = sphi 0, %s71
      %s88 = sphi 0, %s72
      %s94 = sphi 0, %s96
      %s97 = sphi 0, %s94
      %s98 = sphi 0, %s97
      %s114 = sphi 0, %s98
      %s122 = sphi 0, %s124
      %s125 = sphi 0, %s122
      %s126 = sphi 0, %s125
      %s142 = sphi 0, %s126
    $region4: #{tpu_custom_call.1} parent=1 // loop_header_branch
      %21 = sbr.rel (%p19) target = $region8
    $region5: #{tpu_custom_call.1} parent=1 // loop_body
      %s23 = ssub.s32 %s18, 1
      %s24 = ssub.s32 %s18, 2
      %s31 = sadd.s32 1, %s26
      %p32 = scmp.ge.s32.totalorder %s31, 1
      %s33 = scalar_select %p32, 0, %s31
      %s34 = sadd.s32 1, %s25
      %s35 = scalar_select %p32, %s34, %s25
      %p36 = scmp.ge.s32.totalorder %s35, 2
      %s37 = scalar_select %p36, 0, %s35
      %s38 = ssub.s32 %s25, %s37
      %s39 = ssub.s32 %s26, %s33
      %s40 = sor.u32 %s38, %s39
      %p41 = scmp.eq.s32.totalorder %s40, 0
      %s43 = sadd.s32 %s42, 1
      %s44 = scalar_select %p41, %s42, %s43
      %p47 = pneg %p41
      %p48 = scmp.eq.s32.totalorder %s18, 1
      %p49 = por %p47, %p48
      %p50 = scmp.ne.s32.totalorder %s42, %s45
      %p51 = scmp.eq.s32.totalorder %s18, 0
      %p52 = por %p50, %p51
      %p53 = scmp.ne.s32.totalorder %s42, %s45
      %p54 = scmp.eq.s32.totalorder %s23, 1
      %p55 = por %p53, %p54
      %p56 = scmp.ne.s32.totalorder %s45, %s46
      %p57 = scmp.eq.s32.totalorder %s23, 0
      %p58 = por %p56, %p57
      %p59 = scmp.ne.s32.totalorder %s45, %s46
      %p60 = scmp.eq.s32.totalorder %s24, 1
      %p61 = por %p59, %p60
      %p63 = scmp.ne.s32.totalorder %s46, %s62
      %p64 = scmp.eq.s32.totalorder %s24, 0
      %p65 = por %p63, %p64
      %s66 = ssub.s32 %s25, %s37
      %p67 = scmp.eq.s32.totalorder %s66, 0
      %s69 = sadd.s32 %s68, 1
      %s70 = scalar_select %p67, %s68, %s69
      %p73 = pneg %p67
      %p74 = scmp.eq.s32.totalorder %s18, 1
      %p75 = por %p73, %p74
      %p76 = scmp.ne.s32.totalorder %s68, %s71
      %p77 = scmp.eq.s32.totalorder %s18, 0
      %p78 = por %p76, %p77
      %p79 = scmp.ne.s32.totalorder %s68, %s71
      %p80 = scmp.eq.s32.totalorder %s23, 1
      %p81 = por %p79, %p80
      %p82 = scmp.ne.s32.totalorder %s71, %s72
      %p83 = scmp.eq.s32.totalorder %s23, 0
      %p84 = por %p82, %p83
      %p85 = scmp.ne.s32.totalorder %s71, %s72
      %p86 = scmp.eq.s32.totalorder %s24, 1
      %p87 = por %p85, %p86
      %p89 = scmp.ne.s32.totalorder %s72, %s88
      %p90 = scmp.eq.s32.totalorder %s24, 0
      %p91 = por %p89, %p90
      %s92 = ssub.s32 %s25, %s37
      %p93 = scmp.eq.s32.totalorder %s92, 0
      %s95 = sadd.s32 %s94, 1
      %s96 = scalar_select %p93, %s94, %s95
      %p99 = pneg %p93
      %p100 = scmp.eq.s32.totalorder %s18, 1
      %p101 = por %p99, %p100
      %p102 = scmp.ne.s32.totalorder %s94, %s97
      %p103 = scmp.eq.s32.totalorder %s18, 0
      %p104 = por %p102, %p103
      %p105 = scmp.ne.s32.totalorder %s94, %s97
      %p106 = scmp.eq.s32.totalorder %s23, 1
      %p107 = por %p105, %p106
      %p108 = scmp.ne.s32.totalorder %s97, %s98
      %p109 = scmp.eq.s32.totalorder %s23, 0
      %p110 = por %p108, %p109
      %p111 = scmp.ne.s32.totalorder %s97, %s98
      %p112 = scmp.eq.s32.totalorder %s24, 1
      %p113 = por %p111, %p112
      %p115 = scmp.ne.s32.totalorder %s98, %s114
      %p116 = scmp.eq.s32.totalorder %s24, 0
      %p117 = por %p115, %p116
      %s118 = ssub.s32 %s25, %s37
      %s119 = ssub.s32 %s26, %s33
      %s120 = sor.u32 %s118, %s119
      %p121 = scmp.eq.s32.totalorder %s120, 0
      %s123 = sadd.s32 %s122, 1
      %s124 = scalar_select %p121, %s122, %s123
      %p127 = pneg %p121
      %p128 = scmp.eq.s32.totalorder %s18, 1
      %p129 = por %p127, %p128
      %p130 = scmp.ne.s32.totalorder %s122, %s125
      %p131 = scmp.eq.s32.totalorder %s18, 0
      %p132 = por %p130, %p131
      %p133 = scmp.ne.s32.totalorder %s122, %s125
      %p134 = scmp.eq.s32.totalorder %s23, 1
      %p135 = por %p133, %p134
      %p136 = scmp.ne.s32.totalorder %s125, %s126
      %p137 = scmp.eq.s32.totalorder %s23, 0
      %p138 = por %p136, %p137
      %p139 = scmp.ne.s32.totalorder %s125, %s126
      %p140 = scmp.eq.s32.totalorder %s24, 1
      %p141 = por %p139, %p140
      %p143 = scmp.ne.s32.totalorder %s126, %s142
      %p144 = scmp.eq.s32.totalorder %s24, 0
      %p145 = por %p143, %p144
      %p146 = scmp.le.s32.totalorder 1, %s18
      %p147 = scmp.lt.s32.totalorder %s18, 3
      %p148 = pnand %p146, %p147
      %p149 = pneg %p148
      // Predicated region
      $region9: #{tpu_custom_call.1} parent=5 // pred_check
        _
      $region10: #{tpu_custom_call.1} parent=5 // pred_check_branch
        %151 = sbr.rel (%p148) target = $region12
      $region11: #{tpu_custom_call.1} parent=5 // pred_region
        %s152 = ssub.s32 %s18, 1
      $region12: #{tpu_custom_call.1} parent=5 // pred_fallthru
        _
      %p153 = scmp.lt.s32.totalorder %s18, 2
      // Predicated region
      $region13: #{tpu_custom_call.1} parent=5 // pred_check
        %p154 = pneg %p153
      $region14: #{tpu_custom_call.1} parent=5 // pred_check_branch
        %156 = sbr.rel (%p154) target = $region16
      $region15: #{tpu_custom_call.1} parent=5 // pred_region
        // Predicated region
        $region17: #{tpu_custom_call.1} parent=15 // pred_check
          %p157 = pneg %p52
        $region18: #{tpu_custom_call.1} parent=15 // pred_check_branch
          %159 = sbr.rel (%p157) target = $region20
        $region19: #{tpu_custom_call.1} parent=15 // pred_region
          %s160 = sand.u32 %s42, 1
          %s161 = scalar_lea.sflag [#allocation3], %s160
          %s162 = sand.u32 %s42, 1
          %s163 = smul.addr %s162, 16
          %s164 = scalar_lea.vmem [#allocation2], %s163
          %s165 = smul.u32 2, %s26
          %s167 = ssub.s32 256, 256
          %168 = vsyncadd %s161, %s167
          %s169 = smul.addr %s25, 2
          %s170 = sadd.s32 %s165, %s169
          %s171 = smul.addr %s170, 128
          %s172 = scalar_lea.hbm %s0, %s171
          %s173 = sshll.u32 %s164, 4
          %s174 = int_to_ptr.vmem [resolvable:$true] %s173
          %179 = dma.hbm_to_vmem [thread:$0]  %s172, 256, %s174, %s161, 128, 128, 8
        $region20: #{tpu_custom_call.1} parent=15 // pred_fallthru
          _
        // Predicated region
        $region21: #{tpu_custom_call.1} parent=15 // pred_check
          %p180 = pneg %p78
        $region22: #{tpu_custom_call.1} parent=15 // pred_check_branch
          %182 = sbr.rel (%p180) target = $region24
        $region23: #{tpu_custom_call.1} parent=15 // pred_region
          %s183 = sand.u32 %s18, 1
          %s184 = scalar_lea.sflag [#allocation6], %s183
          %s185 = sand.u32 %s68, 1
          %s186 = smul.addr %s185, 32
          %s187 = scalar_lea.vmem [#allocation5], %s186
          %s189 = ssub.s32 512, 512
          %190 = vsyncadd %s184, %s189
          %s191 = smul.addr %s25, 4
          %s192 = smul.addr %s191, 128
          %s193 = scalar_lea.hbm %s1, %s192
          %s194 = sshll.u32 %s187, 4
          %s195 = int_to_ptr.vmem [resolvable:$true] %s194
          %200 = dma.hbm_to_vmem [thread:$0]  %s193, 512, %s195, %s184, 128, 128, 8
        $region24: #{tpu_custom_call.1} parent=15 // pred_fallthru
          _
        // Predicated region
        $region25: #{tpu_custom_call.1} parent=15 // pred_check
          %p201 = pneg %p104
        $region26: #{tpu_custom_call.1} parent=15 // pred_check_branch
          %203 = sbr.rel (%p201) target = $region28
        $region27: #{tpu_custom_call.1} parent=15 // pred_region
          %s204 = sand.u32 %s18, 1
          %s205 = scalar_lea.sflag [#allocation6], %s204
          %s206 = sand.u32 %s94, 1
          %s207 = smul.addr %s206, 32
          %s208 = scalar_lea.vmem [#allocation7], %s207
          %s210 = ssub.s32 512, 512
          %211 = vsyncadd %s205, %s210
          %s212 = smul.addr %s25, 4
          %s213 = smul.addr %s212, 128
          %s214 = scalar_lea.hbm %s2, %s213
          %s215 = sshll.u32 %s208, 4
          %s216 = int_to_ptr.vmem [resolvable:$true] %s215
          %221 = dma.hbm_to_vmem [thread:$0]  %s214, 512, %s216, %s205, 128, 128, 8
        $region28: #{tpu_custom_call.1} parent=15 // pred_fallthru
          _
      $region16: #{tpu_custom_call.1} parent=5 // pred_fallthru
        _
      %p222 = scmp.le.s32.totalorder 1, %s18
      %p223 = scmp.lt.s32.totalorder %s18, 3
      %p224 = pnand %p222, %p223
      %p225 = pneg %p224
      // Predicated region
      $region29: #{tpu_custom_call.1} parent=5 // pred_check
        _
      $region30: #{tpu_custom_call.1} parent=5 // pred_check_branch
        %227 = sbr.rel (%p224) target = $region32
      $region31: #{tpu_custom_call.1} parent=5 // pred_region
        %s228 = ssub.s32 %s18, 1
        %s229 = sand.u32 %s45, 1
        %s230 = scalar_lea.sflag [#allocation3], %s229
        %s231 = sand.u32 %s45, 1
        %s232 = smul.addr %s231, 16
        %s233 = scalar_lea.vmem [#allocation2], %s232
        // Predicated region
        $region33: #{tpu_custom_call.1} parent=31 // pred_check
          %p234 = pneg %p58
        $region34: #{tpu_custom_call.1} parent=31 // pred_check_branch
          %236 = sbr.rel (%p234) target = $region36
        $region35: #{tpu_custom_call.1} parent=31 // pred_region
          %237 = dma.done %s230, 256
        $region36: #{tpu_custom_call.1} parent=31 // pred_fallthru
          _
        %s238 = sand.u32 %s23, 1
        %s239 = scalar_lea.sflag [#allocation6], %s238
        %s240 = sand.u32 %s71, 1
        %s241 = smul.addr %s240, 32
        %s242 = scalar_lea.vmem [#allocation5], %s241
        // Predicated region
        $region37: #{tpu_custom_call.1} parent=31 // pred_check
          %p243 = pneg %p84
        $region38: #{tpu_custom_call.1} parent=31 // pred_check_branch
          %245 = sbr.rel (%p243) target = $region40
        $region39: #{tpu_custom_call.1} parent=31 // pred_region
          %246 = dma.done %s239, 512
        $region40: #{tpu_custom_call.1} parent=31 // pred_fallthru
          _
        %s247 = sand.u32 %s23, 1
        %s248 = scalar_lea.sflag [#allocation6], %s247
        %s249 = sand.u32 %s97, 1
        %s250 = smul.addr %s249, 32
        %s251 = scalar_lea.vmem [#allocation7], %s250
        // Predicated region
        $region41: #{tpu_custom_call.1} parent=31 // pred_check
          %p252 = pneg %p110
        $region42: #{tpu_custom_call.1} parent=31 // pred_check_branch
          %254 = sbr.rel (%p252) target = $region44
        $region43: #{tpu_custom_call.1} parent=31 // pred_region
          %255 = dma.done %s248, 512
        $region44: #{tpu_custom_call.1} parent=31 // pred_fallthru
          _
        %s256 = sand.u32 %s45, 1
        %s257 = scalar_lea.sflag [#allocation3], %s256
        %s258 = sand.u32 %s45, 1
        %s259 = smul.addr %s258, 16
        %s260 = scalar_lea.vmem [#allocation2], %s259
        %p261 = pneg %p58
        %p262 = pneg %p55
        %s263 = sand.u32 %s23, 1
        %s264 = scalar_lea.sflag [#allocation6], %s263
        %s265 = sand.u32 %s71, 1
        %s266 = smul.addr %s265, 32
        %s267 = scalar_lea.vmem [#allocation5], %s266
        %p268 = pneg %p84
        %p269 = pneg %p81
        %s270 = sand.u32 %s23, 1
        %s271 = scalar_lea.sflag [#allocation6], %s270
        %s272 = sand.u32 %s97, 1
        %s273 = smul.addr %s272, 32
        %s274 = scalar_lea.vmem [#allocation7], %s273
        %p275 = pneg %p110
        %p276 = pneg %p107
        %p277 = pneg %p138
        %p278 = pneg %p135
        %s279 = sand.u32 %s125, 1
        %s280 = scalar_lea.sflag [#allocation4], %s279
        %s281 = sand.u32 %s125, 1
        %s282 = smul.addr %s281, 16
        %s283 = scalar_lea.vmem [#allocation8], %s282
        %s284 = smul.u32 2, %s28
        %s285 = smul.u32 2, %s28
        %v286 = vld [vmem:[%s233] sm:$0xff]
        %v287 = vld [vmem:[%s233 + $0x8] sm:$0xff]
        %v288 = vld [vmem:[%s242] sm:$0xff]
        %v289 = vld [vmem:[%s242 + $0x8] sm:$0xff]
        %v290 = vld [vmem:[%s242 + $0x10] sm:$0xff]
        %v291 = vld [vmem:[%s242 + $0x18] sm:$0xff]
        %v292 = vld [vmem:[%s251] sm:$0xff]
        %v293 = vld [vmem:[%s251 + $0x8] sm:$0xff]
        %v294 = vld [vmem:[%s251 + $0x10] sm:$0xff]
        %v295 = vld [vmem:[%s251 + $0x18] sm:$0xff]
        %vm296 = vcmask 261120
        %v298 = vsel %vm296, %v288, 0
        %v301 = vsel %vm296, %v289, 0
        %v304 = vsel %vm296, %v290, 0
        %v307 = vsel %vm296, %v291, 0
        %v310 = vsel %vm296, %v286, 0
        %v313 = vsel %vm296, %v287, 0
        %315 = vmatprep.subr.mxu0 0.0
        %316 = vmatpush1.xpose.msra.mxu0 %v310
        %317 = vmatprep.subr.mxu0 0.0
        %318 = vmatpush1.xpose.msra.mxu0 %v313
        %319 = vmatprep.subr.mxu0 0.0
        %320 = vmatpush1.xpose.msra.mxu0 0.0
        %321 = vmatprep.subr.mxu0 0.0
        %322 = vmatpush1.xpose.msra.mxu0 0.0
        %323 = vmatprep.subr.mxu0 0.0
        %324 = vmatpush1.xpose.msra.mxu0 0.0
        %325 = vmatprep.subr.mxu0 0.0
        %326 = vmatpush1.xpose.msra.mxu0 0.0
        %327 = vmatprep.subr.mxu0 0.0
        %328 = vmatpush1.xpose.msra.mxu0 0.0
        %329 = vmatprep.subr.mxu0 0.0
        %330 = vmatpush1.xpose.msra.mxu0 0.0
        %331 = vmatprep.subr.mxu0 0.0
        %332 = vmatpush1.xpose.msra.mxu0 0.0
        %333 = vmatprep.subr.mxu0 0.0
        %334 = vmatpush1.xpose.msra.mxu0 0.0
        %335 = vmatprep.subr.mxu0 0.0
        %336 = vmatpush1.xpose.msra.mxu0 0.0
        %337 = vmatprep.subr.mxu0 0.0
        %338 = vmatpush1.xpose.msra.mxu0 0.0
        %339 = vmatprep.subr.mxu0 0.0
        %340 = vmatpush1.xpose.msra.mxu0 0.0
        %341 = vmatprep.subr.mxu0 0.0
        %342 = vmatpush1.xpose.msra.mxu0 0.0
        %343 = vmatprep.subr.mxu0 0.0
        %344 = vmatpush1.xpose.msra.mxu0 0.0
        %345 = vmatprep.subr.mxu0 0.0
        %346 = vmatpush1.xpose.msra.mxu0 0.0
        %347 = vmatprep.subr.mxu0 0.0
        %348 = vmatpush1.xpose.msra.mxu0 0.0
        %349 = vmatprep.subr.mxu0 0.0
        %350 = vmatpush1.xpose.msra.mxu0 0.0
        %351 = vmatprep.subr.mxu0 0.0
        %352 = vmatpush1.xpose.msra.mxu0 0.0
        %353 = vmatprep.subr.mxu0 0.0
        %354 = vmatpush1.xpose.msra.mxu0 0.0
        %355 = vmatprep.subr.mxu0 0.0
        %356 = vmatpush1.xpose.msra.mxu0 0.0
        %357 = vmatprep.subr.mxu0 0.0
        %358 = vmatpush1.xpose.msra.mxu0 0.0
        %359 = vmatprep.subr.mxu0 0.0
        %360 = vmatpush1.xpose.msra.mxu0 0.0
        %361 = vmatprep.subr.mxu0 0.0
        %362 = vmatpush1.xpose.msra.mxu0 0.0
        %363 = vmatprep.subr.mxu0 0.0
        %364 = vmatpush1.xpose.msra.mxu0 0.0
        %365 = vmatprep.subr.mxu0 0.0
        %366 = vmatpush1.xpose.msra.mxu0 0.0
        %367 = vmatprep.subr.mxu0 0.0
        %368 = vmatpush1.xpose.msra.mxu0 0.0
        %369 = vmatprep.subr.mxu0 0.0
        %370 = vmatpush1.xpose.msra.mxu0 0.0
        %371 = vmatprep.subr.mxu0 0.0
        %372 = vmatpush1.xpose.msra.mxu0 0.0
        %373 = vmatprep.subr.mxu0 0.0
        %374 = vmatpush1.xpose.msra.mxu0 0.0
        %375 = vmatprep.subr.mxu0 0.0
        %376 = vmatpush1.xpose.msra.mxu0 0.0
        %377 = vmatprep.subr.mxu0 0.0
        %378 = vmatpush1.xpose.msra.mxu0 0.0
        %379 = vmatprep.mubr.f32.mxu0 0.0
        %380 = vmatmul.mubr.f32.gmra.mrb[0].mxu0 %v298
        %v381 = vpop.f32.mrb[0].mxu0
        %v382 = vadd.f32 0.0, %v381
        %v383 = vpop.f32.mrb[0].mxu0
        %384 = vmatprep.mubr.f32.mxu0 0.0
        %385 = vmatmul.mubr.f32.gmra.mrb[0].mxu0 %v301
        %v386 = vpop.f32.mrb[0].mxu0
        %v387 = vadd.f32 0.0, %v386
        %v388 = vpop.f32.mrb[0].mxu0
        %389 = vmatprep.mubr.f32.mxu0 0.0
        %390 = vmatmul.mubr.f32.gmra.mrb[0].mxu0 %v304
        %v391 = vpop.f32.mrb[0].mxu0
        %v392 = vadd.f32 0.0, %v391
        %v393 = vpop.f32.mrb[0].mxu0
        %394 = vmatprep.mubr.f32.mxu0 0.0
        %395 = vmatmul.mubr.f32.gmra.mrb[0].mxu0 %v307
        %v396 = vpop.f32.mrb[0].mxu0
        %v397 = vadd.f32 0.0, %v396
        %v398 = vpop.f32.mrb[0].mxu0
        %399 = vdwg.mxu0
        %v400 = vlaneseq
        %v401 = vshrl.u32 %v400, 7
        %vm402 = vcmp.lt.s32.totalorder %v401, 4
        %v403 = vsel %vm402, %v382, -1e+30
        %v404 = vsel %vm402, %v387, -1e+30
        %v405 = vsel %vm402, %v392, -1e+30
        %v406 = vsel %vm402, %v397, -1e+30
        %vm407 = vcmask 130048
        %v408 = vsel %vm407, %v403, -inf
        %v409 = vrot.slane %v408, 4
        %v410 = vmax.f32 %v408, %v409
        %v411 = vrot.slane %v410, 2
        %v412 = vmax.f32 %v410, %v411
        %v413 = vrot.slane %v412, 1
        %v414 = vmax.f32 %v412, %v413
        %v415 = vsel %vm407, %v404, -inf
        %v416 = vrot.slane %v415, 4
        %v417 = vmax.f32 %v415, %v416
        %v418 = vrot.slane %v417, 2
        %v419 = vmax.f32 %v417, %v418
        %v420 = vrot.slane %v419, 1
        %v421 = vmax.f32 %v419, %v420
        %v422 = vsel %vm407, %v405, -inf
        %v423 = vrot.slane %v422, 4
        %v424 = vmax.f32 %v422, %v423
        %v425 = vrot.slane %v424, 2
        %v426 = vmax.f32 %v424, %v425
        %v427 = vrot.slane %v426, 1
        %v428 = vmax.f32 %v426, %v427
        %v429 = vsel %vm407, %v406, -inf
        %v430 = vrot.slane %v429, 4
        %v431 = vmax.f32 %v429, %v430
        %v432 = vrot.slane %v431, 2
        %v433 = vmax.f32 %v431, %v432
        %v434 = vrot.slane %v433, 1
        %v435 = vmax.f32 %v433, %v434
        %v436 = vsub.f32 %v403, %v414
        %v437 = vsub.f32 %v404, %v421
        %v438 = vsub.f32 %v405, %v428
        %v439 = vsub.f32 %v406, %v435
        %v440 = vmul.f32 %v436, 1.442695
        %v441 = vpow.pop %v440
        %v442 = vmul.f32 %v437, 1.442695
        %v443 = vpow.pop %v442
        %v444 = vmul.f32 %v438, 1.442695
        %v445 = vpow.pop %v444
        %v446 = vmul.f32 %v439, 1.442695
        %v447 = vpow.pop %v446
        %v448 = vsel %vm407, %v441, 0.0
        %v449 = vrot.slane %v448, 4
        %v450 = vadd.f32 %v448, %v449
        %v451 = vrot.slane %v450, 2
        %v452 = vadd.f32 %v450, %v451
        %v453 = vrot.slane %v452, 1
        %v454 = vadd.f32 %v452, %v453
        %v455 = vsel %vm407, %v443, 0.0
        %v456 = vrot.slane %v455, 4
        %v457 = vadd.f32 %v455, %v456
        %v458 = vrot.slane %v457, 2
        %v459 = vadd.f32 %v457, %v458
        %v460 = vrot.slane %v459, 1
        %v461 = vadd.f32 %v459, %v460
        %v462 = vsel %vm407, %v445, 0.0
        %v463 = vrot.slane %v462, 4
        %v464 = vadd.f32 %v462, %v463
        %v465 = vrot.slane %v464, 2
        %v466 = vadd.f32 %v464, %v465
        %v467 = vrot.slane %v466, 1
        %v468 = vadd.f32 %v466, %v467
        %v469 = vsel %vm407, %v447, 0.0
        %v470 = vrot.slane %v469, 4
        %v471 = vadd.f32 %v469, %v470
        %v472 = vrot.slane %v471, 2
        %v473 = vadd.f32 %v471, %v472
        %v474 = vrot.slane %v473, 1
        %v475 = vadd.f32 %v473, %v474
        %v476 = vrcp.pop %v454
        %v477 = vrcp.pop %v461
        %v478 = vrcp.pop %v468
        %v479 = vrcp.pop %v475
        %v480 = vmul.f32 %v441, %v476
        %v481 = vmul.f32 %v443, %v477
        %v482 = vmul.f32 %v445, %v478
        %v483 = vmul.f32 %v447, %v479
        %484 = vxpose.xlu0.b32.start [1/16] %v480, 128
        %485 = vxpose.xlu0.b32.cont [2/16] %v481, 128
        %486 = vxpose.xlu0.b32.cont [3/16] %v482, 128
        %487 = vxpose.xlu0.b32.cont [4/16] %v483, 128
        %488 = vxpose.xlu0.b32.cont [5/16] 0.0, 128
        %489 = vxpose.xlu0.b32.cont [6/16] 0.0, 128
        %490 = vxpose.xlu0.b32.cont [7/16] 0.0, 128
        %491 = vxpose.xlu0.b32.cont [8/16] 0.0, 128
        %492 = vxpose.xlu0.b32.cont [9/16] 0.0, 128
        %493 = vxpose.xlu0.b32.cont [10/16] 0.0, 128
        %494 = vxpose.xlu0.b32.cont [11/16] 0.0, 128
        %495 = vxpose.xlu0.b32.cont [12/16] 0.0, 128
        %496 = vxpose.xlu0.b32.cont [13/16] 0.0, 128
        %497 = vxpose.xlu0.b32.cont [14/16] 0.0, 128
        %498 = vxpose.xlu0.b32.cont [15/16] 0.0, 128
        %499 = vxpose.xlu0.b32.end [16/16] 0.0, 128
        %v500 = vpop.trf.xlu0
        %v501 = vpop.trf.xlu0
        %v502 = vpop.trf.xlu0
        %v503 = vpop.trf.xlu0
        %v504 = vpop.trf.xlu0
        %v505 = vpop.trf.xlu0
        %v506 = vpop.trf.xlu0
        %v507 = vpop.trf.xlu0
        %v508 = vpop.trf.xlu0
        %v509 = vpop.trf.xlu0
        %v510 = vpop.trf.xlu0
        %v511 = vpop.trf.xlu0
        %v512 = vpop.trf.xlu0
        %v513 = vpop.trf.xlu0
        %v514 = vpop.trf.xlu0
        %v515 = vpop.trf.xlu0
        %v517 = vsel %vm296, %v500, 0
        %v520 = vsel %vm296, %v501, 0
        %522 = vmatprep.subr.mxu0 0.0
        %523 = vmatpush1.msra.mxu0 %v292
        %524 = vmatprep.subr.mxu0 0.0
        %525 = vmatpush1.msra.mxu0 %v293
        %526 = vmatprep.subr.mxu0 0.0
        %527 = vmatpush1.msra.mxu0 %v294
        %528 = vmatprep.subr.mxu0 0.0
        %529 = vmatpush1.msra.mxu0 %v295
        %530 = vmatprep.subr.mxu0 0.0
        %531 = vmatpush1.msra.mxu0 0.0
        %532 = vmatprep.subr.mxu0 0.0
        %533 = vmatpush1.msra.mxu0 0.0
        %534 = vmatprep.subr.mxu0 0.0
        %535 = vmatpush1.msra.mxu0 0.0
        %536 = vmatprep.subr.mxu0 0.0
        %537 = vmatpush1.msra.mxu0 0.0
        %538 = vmatprep.subr.mxu0 0.0
        %539 = vmatpush1.msra.mxu0 0.0
        %540 = vmatprep.subr.mxu0 0.0
        %541 = vmatpush1.msra.mxu0 0.0
        %542 = vmatprep.subr.mxu0 0.0
        %543 = vmatpush1.msra.mxu0 0.0
        %544 = vmatprep.subr.mxu0 0.0
        %545 = vmatpush1.msra.mxu0 0.0
        %546 = vmatprep.subr.mxu0 0.0
        %547 = vmatpush1.msra.mxu0 0.0
        %548 = vmatprep.subr.mxu0 0.0
        %549 = vmatpush1.msra.mxu0 0.0
        %550 = vmatprep.subr.mxu0 0.0
        %551 = vmatpush1.msra.mxu0 0.0
        %552 = vmatprep.subr.mxu0 0.0
        %553 = vmatpush1.msra.mxu0 0.0
        %554 = vmatprep.subr.mxu0 0.0
        %555 = vmatpush1.msra.mxu0 0.0
        %556 = vmatprep.subr.mxu0 0.0
        %557 = vmatpush1.msra.mxu0 0.0
        %558 = vmatprep.subr.mxu0 0.0
        %559 = vmatpush1.msra.mxu0 0.0
        %560 = vmatprep.subr.mxu0 0.0
        %561 = vmatpush1.msra.mxu0 0.0
        %562 = vmatprep.subr.mxu0 0.0
        %563 = vmatpush1.msra.mxu0 0.0
        %564 = vmatprep.subr.mxu0 0.0
        %565 = vmatpush1.msra.mxu0 0.0
        %566 = vmatprep.subr.mxu0 0.0
        %567 = vmatpush1.msra.mxu0 0.0
        %568 = vmatprep.subr.mxu0 0.0
        %569 = vmatpush1.msra.mxu0 0.0
        %570 = vmatprep.subr.mxu0 0.0
        %571 = vmatpush1.msra.mxu0 0.0
        %572 = vmatprep.subr.mxu0 0.0
        %573 = vmatpush1.msra.mxu0 0.0
        %574 = vmatprep.subr.mxu0 0.0
        %575 = vmatpush1.msra.mxu0 0.0
        %576 = vmatprep.subr.mxu0 0.0
        %577 = vmatpush1.msra.mxu0 0.0
        %578 = vmatprep.subr.mxu0 0.0
        %579 = vmatpush1.msra.mxu0 0.0
        %580 = vmatprep.subr.mxu0 0.0
        %581 = vmatpush1.msra.mxu0 0.0
        %582 = vmatprep.subr.mxu0 0.0
        %583 = vmatpush1.msra.mxu0 0.0
        %584 = vmatprep.subr.mxu0 0.0
        %585 = vmatpush1.msra.mxu0 0.0
        %586 = vmatprep.mubr.f32.mxu0 0.0
        %587 = vmatmul.mubr.f32.gmra.mrb[0].mxu0 %v517
        %v588 = vpop.f32.mrb[0].mxu0
        %v589 = vadd.f32 0.0, %v588
        %v590 = vpop.f32.mrb[0].mxu0
        %591 = vmatprep.mubr.f32.mxu0 0.0
        %592 = vmatmul.mubr.f32.gmra.mrb[0].mxu0 %v520
        %v593 = vpop.f32.mrb[0].mxu0
        %v594 = vadd.f32 0.0, %v593
        %v595 = vpop.f32.mrb[0].mxu0
        %596 = vdwg.mxu0
        %597 = vst.msk [vmem:[%s283] sm:$0xff] %vm296, %v589
        %598 = vst.msk [vmem:[%s283 + $0x8] sm:$0xff] %vm296, %v594
        %s599 = sand.u32 %s125, 1
        %s600 = scalar_lea.sflag [#allocation4], %s599
        %s601 = sand.u32 %s125, 1
        %s602 = smul.addr %s601, 16
        %s603 = scalar_lea.vmem [#allocation8], %s602
        // Predicated region
        $region45: #{tpu_custom_call.1} parent=31 // pred_check
          %p604 = pneg %p135
        $region46: #{tpu_custom_call.1} parent=31 // pred_check_branch
          %606 = sbr.rel (%p604) target = $region48
        $region47: #{tpu_custom_call.1} parent=31 // pred_region
          %s607 = smul.u32 2, %s28
          %s609 = ssub.s32 256, 256
          %610 = vsyncadd %s600, %s609
          %s611 = smul.addr %s27, 2
          %s612 = sadd.s32 %s607, %s611
          %s613 = smul.addr %s612, 128
          %s614 = scalar_lea.hbm %s3, %s613
          %s615 = sshll.u32 %s603, 4
          %s616 = int_to_ptr.vmem [resolvable:$true] %s615
          %621 = dma.vmem_to_hbm [thread:$0]  %s616, 256, %s614, %s600, 128, 128, 8
        $region48: #{tpu_custom_call.1} parent=31 // pred_fallthru
          _
      $region32: #{tpu_custom_call.1} parent=5 // pred_fallthru
        _
      %p622 = scmp.le.s32.totalorder 2, %s18
      // Predicated region
      $region49: #{tpu_custom_call.1} parent=5 // pred_check
        %p623 = pneg %p622
      $region50: #{tpu_custom_call.1} parent=5 // pred_check_branch
        %625 = sbr.rel (%p623) target = $region52
      $region51: #{tpu_custom_call.1} parent=5 // pred_region
        %s626 = ssub.s32 %s18, 2
        // Predicated region
        $region53: #{tpu_custom_call.1} parent=51 // pred_check
          %p627 = pneg %p141
        $region54: #{tpu_custom_call.1} parent=51 // pred_check_branch
          %629 = sbr.rel (%p627) target = $region56
        $region55: #{tpu_custom_call.1} parent=51 // pred_region
          %s630 = sand.u32 %s126, 1
          %s631 = scalar_lea.sflag [#allocation4], %s630
          %s632 = sand.u32 %s126, 1
          %s633 = smul.addr %s632, 16
          %s634 = scalar_lea.vmem [#allocation8], %s633
          %635 = dma.done %s631, 256
        $region56: #{tpu_custom_call.1} parent=51 // pred_fallthru
          _
      $region52: #{tpu_custom_call.1} parent=5 // pred_fallthru
        _
    $region6: #{tpu_custom_call.1} parent=1 // loop_footer
      %s22 = sadd.s32 1, %s18
    $region7: #{tpu_custom_call.1} parent=1 // loop_footer_branch
      %17 = sbr.rel target = $region3
    $region8: #{tpu_custom_call.1} parent=1 // loop_exit
      _
    %636 = vsyncpa [#allocation3], 1
    %s637 = scalar_lea.sflag [#allocation3], 1
    %638 = vsyncpa %s637, 1
    %639 = vsyncpa [#allocation6], 1
    %s640 = scalar_lea.sflag [#allocation6], 1
    %641 = vsyncpa %s640, 1
    %642 = vsyncpa [#allocation4], 1
    %s643 = scalar_lea.sflag [#allocation4], 1
    %644 = vsyncpa %s643, 1

</llo_original>
